<compile_context>
chip_gen: v5e
topology: v5e:2x2
jax: 0.10.0
libtpu: 0.0.40
codegen_flags: <defaults>
</compile_context>

<pallas_src>
import functools
import math

import jax
import jax.numpy as jnp
from jax import lax
from jax.experimental import pallas as pl
from jax.experimental.pallas import tpu as pltpu


def _input_process_kernel(x_ref, w_ref, b_ref, o_ref, *, compute_dtype):
    """One (batch, frame-tile) grid step.

    x_ref: (nfeats, TILE_F)  native input dtype — feats on sublanes, frames on lanes
    w_ref: (nfeats, N)       compute dtype (PyTorch weight transposed once, resident)
    b_ref: (1, N)            float32 (resident)
    o_ref: (TILE_F, N)       output dtype
    """
    x = x_ref[...]
    if x.dtype != compute_dtype:
        # Cast in VMEM (VPU) — avoids a wrapper-side cast pass over HBM.
        x = x.astype(compute_dtype)
    # out[f, n] = sum_k x[k, f] * w[k, n]  ==  x^T @ w  (TN matmul on the MXU);
    # this is how squeeze(1) + permute(0, 2, 1) are realized with no HBM transpose.
    acc = lax.dot_general(
        x, w_ref[...],
        dimension_numbers=(((0,), (0,)), ((), ())),
        preferred_element_type=jnp.float32,
    )
    o_ref[...] = (acc + b_ref[...]).astype(o_ref.dtype)


def input_process(x, weight, bias, *, compute_dtype=jnp.bfloat16, frame_tile=512):
    """x: [bs, 1, nfeats, nframes]; weight: [latent_dim, nfeats] (PyTorch layout);
    bias: [latent_dim]. Returns [bs, nframes, latent_dim] in x.dtype."""
    bs, one, nfeats, nframes = x.shape
    assert one == 1
    latent_dim, wk = weight.shape
    assert wk == nfeats

    out_dtype = x.dtype

    # One-time tiny parameter prep (in a real model these would be pre-laid-out).
    w_kn = weight.T.astype(compute_dtype)              # (nfeats, latent_dim)
    b2d = bias.reshape(1, latent_dim).astype(jnp.float32)

    # Frame tiling: use the full extent if it fits in one tile, otherwise a
    # multiple-of-128 tile (lane-dim BlockSpec constraint). Ragged last tiles
    # are handled by Pallas: OOB frames only affect output rows that are
    # masked on write (the contraction axis nfeats is never tiled, so no
    # garbage leaks into valid rows).
    if nframes <= frame_tile:
        tile_f = nframes
    else:
        tile_f = max(128, (frame_tile // 128) * 128)
    grid = (bs, pl.cdiv(nframes, tile_f))

    x_bytes = jnp.dtype(x.dtype).itemsize
    w_bytes = jnp.dtype(compute_dtype).itemsize
    out_bytes = jnp.dtype(out_dtype).itemsize
    cost = pl.CostEstimate(
        flops=2 * bs * nframes * nfeats * latent_dim,
        transcendentals=0,
        bytes_accessed=(bs * nfeats * nframes * x_bytes
                        + nfeats * latent_dim * w_bytes
                        + latent_dim * 4
                        + bs * nframes * latent_dim * out_bytes),
    )

    kernel = functools.partial(_input_process_kernel, compute_dtype=compute_dtype)

    out = pl.pallas_call(
        kernel,
        out_shape=jax.ShapeDtypeStruct((bs, nframes, latent_dim), out_dtype),
        grid_spec=pltpu.PrefetchScalarGridSpec(
            num_scalar_prefetch=0,
            grid=grid,
            in_specs=[
                # x: squeeze batch + singleton dims, tile frames; feature axis whole.
                pl.BlockSpec((None, None, nfeats, tile_f),
                             lambda b, f: (b, 0, 0, f)),
                # weight / bias: constant block index -> stay resident in VMEM.
                pl.BlockSpec((nfeats, latent_dim), lambda b, f: (0, 0)),
                pl.BlockSpec((1, latent_dim), lambda b, f: (0, 0)),
            ],
            out_specs=pl.BlockSpec((None, tile_f, latent_dim),
                                   lambda b, f: (b, f, 0)),
        ),
        compiler_params=pltpu.CompilerParams(
            # Independent output tiles: lets Mosaic shard across both
            # TensorCores on v7x; no effect (but harmless) on v5e/v6e.
            dimension_semantics=("parallel", "parallel"),
        ),
        cost_estimate=cost,
    )(x, w_kn, b2d)

    return out


def init_params(key, nfeats, latent_dim):
    # Deterministic init mimicking nn.Linear: U(-1/sqrt(nfeats), 1/sqrt(nfeats)).
    kw, kb = jax.random.split(key)
    bound = 1.0 / math.sqrt(nfeats)
    weight = jax.random.uniform(kw, (latent_dim, nfeats), jnp.float32, -bound, bound)
    bias = jax.random.uniform(kb, (latent_dim,), jnp.float32, -bound, bound)
    return weight, bias


if __name__ == "__main__":
    key = jax.random.PRNGKey(0)
    k_x, k_p = jax.random.split(key)

    bs, nfeats, nframes, latent_dim = 2, 8, 16, 128
    x = jax.random.normal(k_x, (bs, 1, nfeats, nframes), jnp.float32)
    weight, bias = init_params(k_p, nfeats, latent_dim)

    # Pure-JAX f32 reference for the PyTorch forward.
    ref_f32 = jnp.einsum("bfn,lf->bnl", x[:, 0, :, :], weight) + bias

    # f32 compute path: must match the reference tightly.
    out_f32 = jax.block_until_ready(
        input_process(x, weight, bias, compute_dtype=jnp.float32))
    assert out_f32.shape == (bs, nframes, latent_dim)
    assert jnp.allclose(out_f32, ref_f32, atol=1e-5, rtol=1e-5)

    # Default bf16 compute path (f32 accumulation): match a bf16-cast reference
    # tightly and the f32 reference to bf16 precision.
    out_bf16 = jax.block_until_ready(input_process(x, weight, bias))
    assert out_bf16.shape == (bs, nframes, latent_dim)
    ref_bf16 = jnp.einsum(
        "bfn,lf->bnl",
        x[:, 0, :, :].astype(jnp.bfloat16),
        weight.astype(jnp.bfloat16),
        preferred_element_type=jnp.float32,
    ) + bias
    assert jnp.allclose(out_bf16, ref_bf16, atol=1e-3, rtol=1e-3)
    assert jnp.allclose(out_bf16, ref_f32, atol=1e-1, rtol=1e-1)

    # Also exercise a frame count that forces multi-tile + ragged last tile.
    nframes2 = 700
    x2 = jax.random.normal(k_x, (bs, 1, nfeats, nframes2), jnp.float32)
    ref2 = jnp.einsum("bfn,lf->bnl", x2[:, 0, :, :], weight) + bias
    out2 = jax.block_until_ready(
        input_process(x2, weight, bias, compute_dtype=jnp.float32))
    assert out2.shape == (bs, nframes2, latent_dim)
    assert jnp.allclose(out2, ref2, atol=1e-5, rtol=1e-5)

    print("KERNEL_OK")
</pallas_src>

<mosaic_0001>
module attributes {stable_mosaic.version = 11 : i64} {
  func.func @_input_process_kernel(%arg0: i32, %arg1: i32, %arg2: memref<1x1x8x16xf32, #tpu.memory_space<vmem>>, %arg3: memref<8x128xf32, #tpu.memory_space<vmem>>, %arg4: memref<1x128xf32, #tpu.memory_space<vmem>>, %arg5: memref<1x16x128xf32, #tpu.memory_space<vmem>>) attributes {dimension_semantics = [#tpu.dimension_semantics<parallel>, #tpu.dimension_semantics<parallel>], iteration_bounds = array<i64: 2, 1>, scalar_prefetch = 0 : i64, scratch_operands = 0 : i64, tpu.core_type = #tpu.core_type<tc>, window_params = [{transform_indices = @transform_0, window_bounds = array<i64: 1, 1, 8, 16>}, {pipeline_mode = #tpu.pipeline_mode<synchronous>, transform_indices = @transform_1, window_bounds = array<i64: 8, 128>}, {pipeline_mode = #tpu.pipeline_mode<synchronous>, transform_indices = @transform_2, window_bounds = array<i64: 1, 128>}, {transform_indices = @transform_3, window_bounds = array<i64: 1, 16, 128>}]} {
    %c0 = arith.constant 0 : index
    %c0_0 = arith.constant 0 : index
    %c0_1 = arith.constant 0 : index
    %c0_2 = arith.constant 0 : index
    %0 = vector.load %arg2[%c0, %c0_0, %c0_1, %c0_2] : memref<1x1x8x16xf32, #tpu.memory_space<vmem>>, vector<1x1x8x16xf32>
    %1 = vector.shape_cast %0 : vector<1x1x8x16xf32> to vector<8x16xf32>
    %c0_3 = arith.constant 0 : index
    %c0_4 = arith.constant 0 : index
    %2 = vector.load %arg3[%c0_3, %c0_4] : memref<8x128xf32, #tpu.memory_space<vmem>>, vector<8x128xf32>
    %cst = arith.constant dense<0.000000e+00> : vector<16x128xf32>
    %3 = tpu.matmul %1, %2, %cst {dimension_numbers = #tpu.dot_dimension_numbers<[0], [0], [1], [1], [0, 1, 1, 1], [], []>} : vector<8x16xf32>, vector<8x128xf32>, vector<16x128xf32> -> vector<16x128xf32>
    %c0_5 = arith.constant 0 : index
    %c0_6 = arith.constant 0 : index
    %4 = vector.load %arg4[%c0_5, %c0_6] : memref<1x128xf32, #tpu.memory_space<vmem>>, vector<1x128xf32>
    %5 = vector.broadcast %4 : vector<1x128xf32> to vector<16x128xf32>
    %6 = arith.addf %3, %5 : vector<16x128xf32>
    %c0_7 = arith.constant 0 : index
    %c0_8 = arith.constant 0 : index
    %c0_9 = arith.constant 0 : index
    %7 = vector.load %arg5[%c0_7, %c0_8, %c0_9] : memref<1x16x128xf32, #tpu.memory_space<vmem>>, vector<1x16x128xf32>
    %8 = vector.shape_cast %7 : vector<1x16x128xf32> to vector<16x128xf32>
    %9 = vector.shape_cast %6 : vector<16x128xf32> to vector<1x16x128xf32>
    tpu.vector_store %arg5[%c0_7, %c0_8, %c0_9], %9 {strides = array<i32>} : memref<1x16x128xf32, #tpu.memory_space<vmem>>, vector<1x16x128xf32>,
    return
  }
  func.func @transform_0(%arg0: i32, %arg1: i32) -> (i32, i32, i32, i32) {
    %c0_i32 = arith.constant 0 : i32
    %c0_i32_0 = arith.constant 0 : i32
    %c0_i32_1 = arith.constant 0 : i32
    return %arg0, %c0_i32, %c0_i32_0, %arg1 : i32, i32, i32, i32
  }
  func.func @transform_1(%arg0: i32, %arg1: i32) -> (i32, i32) {
    %c0_i32 = arith.constant 0 : i32
    %c0_i32_0 = arith.constant 0 : i32
    %c0_i32_1 = arith.constant 0 : i32
    return %c0_i32, %c0_i32_0 : i32, i32
  }
  func.func @transform_2(%arg0: i32, %arg1: i32) -> (i32, i32) {
    %c0_i32 = arith.constant 0 : i32
    %c0_i32_0 = arith.constant 0 : i32
    %c0_i32_1 = arith.constant 0 : i32
    return %c0_i32, %c0_i32_0 : i32, i32
  }
  func.func @transform_3(%arg0: i32, %arg1: i32) -> (i32, i32, i32) {
    %c0_i32 = arith.constant 0 : i32
    %c0_i32_0 = arith.constant 0 : i32
    return %arg0, %arg1, %c0_i32 : i32, i32, i32
  }
}

</mosaic_0001>

<llo_original>
// kernel: tpu_custom_call.1
$region0: #{tpu_custom_call.1}
  #allocation0 [shape = 'u32[]', space=smem, size = 0x4, offset = 0x4, fixed_abs, tag = 'smem constant byte address 0x4 - core index']
  #allocation1 [shape = 'u32[72,128]{1,0:T(1,128)}', space=vmem, size = 0x9000, scoped, tag = 'internal scratch']
  %s0 = inlined_call_operand.hbm [shape: f32[2,1,8,16], index: 0, kind: input, shape index: {}]
  %s1 = inlined_call_operand.hbm [shape: f32[8,128], index: 1, kind: input, shape index: {}]
  %s2 = inlined_call_operand.vmem [shape: f32[1,128], index: 2, kind: input, shape index: {}]
  %s3 = inlined_call_operand.hbm [shape: f32[2,16,128], index: 3, kind: output, shape index: {}]
  %s4 = sld [smem:[#allocation0]]
  $region53: #{tpu_custom_call.1} parent=0
    _
  %s6 = ssub.s32 1, %s4
  %s7 = scalar_select 0, %s6, %s4
  $region1: #{tpu_custom_call.1} parent=0
    #allocation2 [shape = 'u8[8192]{0}', space=vmem, size = 0x2000, scoped, tag = 'input window, operand 0']
    #allocation3 [shape = 's32[2]{0}', space=sflag, size = 0x8, scoped, tag = 'scoped memory for tpu_custom_call.1']
    #allocation4 [shape = 's32[2]{0}', space=sflag, size = 0x8, scoped, tag = 'scoped memory for tpu_custom_call.1']
    #allocation5 [shape = 'u8[4096]{0}', space=vmem, size = 0x1000, scoped, tag = 'input window, operand 1, single buffered']
    #allocation6 [shape = 's32[1]{0}', space=sflag, size = 0x4, scoped, tag = 'scoped memory for tpu_custom_call.1']
    #allocation7 [shape = 'u8[16384]{0}', space=vmem, size = 0x4000, scoped, tag = 'output window, operand 0']
    %8 = vsyncpa [#allocation3], 0
    %s9 = scalar_lea.sflag [#allocation3], 1
    %10 = vsyncpa %s9, 0
    %11 = vsyncpa [#allocation6], 0
    %12 = vsyncpa [#allocation4], 0
    %s13 = scalar_lea.sflag [#allocation4], 1
    %14 = vsyncpa %s13, 0
    loop: start=0, step=1, limit=4
    $region2: #{tpu_custom_call.1} parent=1 // loop_pre_header
      _
    $region3: #{tpu_custom_call.1} parent=1 // loop_header
      %s16 = sphi 0, %s20
      %p17 = scmp.ge.s32.totalorder %s16, 4
      %s23 = sphi 0, %s35
      %s24 = sphi 0, %s31
      %s25 = sphi 0, %s23
      %s26 = sphi 0, %s24
      %s27 = sphi 0, %s25
      %s28 = sphi 0, %s26
      %s40 = sphi 0, %s42
      %s43 = sphi 0, %s40
      %s44 = sphi 0, %s43
      %s60 = sphi 0, %s44
      %s64 = sphi 0, %s64
      %s66 = sphi 0, %s64
      %s67 = sphi 0, %s66
      %s81 = sphi 0, %s67
      %s85 = sphi 0, %s85
      %s87 = sphi 0, %s85
      %s88 = sphi 0, %s87
      %s102 = sphi 0, %s88
      %s110 = sphi 0, %s112
      %s113 = sphi 0, %s110
      %s114 = sphi 0, %s113
      %s130 = sphi 0, %s114
    $region4: #{tpu_custom_call.1} parent=1 // loop_header_branch
      %19 = sbr.rel (%p17) target = $region8
    $region5: #{tpu_custom_call.1} parent=1 // loop_body
      %s21 = ssub.s32 %s16, 1
      %s22 = ssub.s32 %s16, 2
      %s29 = sadd.s32 1, %s24
      %p30 = scmp.ge.s32.totalorder %s29, 1
      %s31 = scalar_select %p30, 0, %s29
      %s32 = sadd.s32 1, %s23
      %s33 = scalar_select %p30, %s32, %s23
      %p34 = scmp.ge.s32.totalorder %s33, 2
      %s35 = scalar_select %p34, 0, %s33
      %s36 = ssub.s32 %s23, %s35
      %s37 = ssub.s32 %s24, %s31
      %s38 = sor.u32 %s36, %s37
      %p39 = scmp.eq.s32.totalorder %s38, 0
      %s41 = sadd.s32 %s40, 1
      %s42 = scalar_select %p39, %s40, %s41
      %p45 = pneg %p39
      %p46 = scmp.eq.s32.totalorder %s16, 1
      %p47 = por %p45, %p46
      %p48 = scmp.ne.s32.totalorder %s40, %s43
      %p49 = scmp.eq.s32.totalorder %s16, 0
      %p50 = por %p48, %p49
      %p51 = scmp.ne.s32.totalorder %s40, %s43
      %p52 = scmp.eq.s32.totalorder %s21, 1
      %p53 = por %p51, %p52
      %p54 = scmp.ne.s32.totalorder %s43, %s44
      %p55 = scmp.eq.s32.totalorder %s21, 0
      %p56 = por %p54, %p55
      %p57 = scmp.ne.s32.totalorder %s43, %s44
      %p58 = scmp.eq.s32.totalorder %s22, 1
      %p59 = por %p57, %p58
      %p61 = scmp.ne.s32.totalorder %s44, %s60
      %p62 = scmp.eq.s32.totalorder %s22, 0
      %p63 = por %p61, %p62
      %s65 = sadd.s32 %s64, 1
      %p68 = scmp.eq.s32.totalorder %s16, 1
      %p69 = scmp.ne.s32.totalorder %s64, %s66
      %p70 = scmp.eq.s32.totalorder %s16, 0
      %p71 = por %p69, %p70
      %p72 = scmp.ne.s32.totalorder %s64, %s66
      %p73 = scmp.eq.s32.totalorder %s21, 1
      %p74 = por %p72, %p73
      %p75 = scmp.ne.s32.totalorder %s66, %s67
      %p76 = scmp.eq.s32.totalorder %s21, 0
      %p77 = por %p75, %p76
      %p78 = scmp.ne.s32.totalorder %s66, %s67
      %p79 = scmp.eq.s32.totalorder %s22, 1
      %p80 = por %p78, %p79
      %p82 = scmp.ne.s32.totalorder %s67, %s81
      %p83 = scmp.eq.s32.totalorder %s22, 0
      %p84 = por %p82, %p83
      %s86 = sadd.s32 %s85, 1
      %p89 = scmp.eq.s32.totalorder %s16, 1
      %p90 = scmp.ne.s32.totalorder %s85, %s87
      %p91 = scmp.eq.s32.totalorder %s16, 0
      %p92 = por %p90, %p91
      %p93 = scmp.ne.s32.totalorder %s85, %s87
      %p94 = scmp.eq.s32.totalorder %s21, 1
      %p95 = por %p93, %p94
      %p96 = scmp.ne.s32.totalorder %s87, %s88
      %p97 = scmp.eq.s32.totalorder %s21, 0
      %p98 = por %p96, %p97
      %p99 = scmp.ne.s32.totalorder %s87, %s88
      %p100 = scmp.eq.s32.totalorder %s22, 1
      %p101 = por %p99, %p100
      %p103 = scmp.ne.s32.totalorder %s88, %s102
      %p104 = scmp.eq.s32.totalorder %s22, 0
      %p105 = por %p103, %p104
      %s106 = ssub.s32 %s23, %s35
      %s107 = ssub.s32 %s24, %s31
      %s108 = sor.u32 %s106, %s107
      %p109 = scmp.eq.s32.totalorder %s108, 0
      %s111 = sadd.s32 %s110, 1
      %s112 = scalar_select %p109, %s110, %s111
      %p115 = pneg %p109
      %p116 = scmp.eq.s32.totalorder %s16, 1
      %p117 = por %p115, %p116
      %p118 = scmp.ne.s32.totalorder %s110, %s113
      %p119 = scmp.eq.s32.totalorder %s16, 0
      %p120 = por %p118, %p119
      %p121 = scmp.ne.s32.totalorder %s110, %s113
      %p122 = scmp.eq.s32.totalorder %s21, 1
      %p123 = por %p121, %p122
      %p124 = scmp.ne.s32.totalorder %s113, %s114
      %p125 = scmp.eq.s32.totalorder %s21, 0
      %p126 = por %p124, %p125
      %p127 = scmp.ne.s32.totalorder %s113, %s114
      %p128 = scmp.eq.s32.totalorder %s22, 1
      %p129 = por %p127, %p128
      %p131 = scmp.ne.s32.totalorder %s114, %s130
      %p132 = scmp.eq.s32.totalorder %s22, 0
      %p133 = por %p131, %p132
      %p134 = scmp.le.s32.totalorder 1, %s16
      %p135 = scmp.lt.s32.totalorder %s16, 3
      %p136 = pnand %p134, %p135
      %p137 = pneg %p136
      // Predicated region
      $region9: #{tpu_custom_call.1} parent=5 // pred_check
        _
      $region10: #{tpu_custom_call.1} parent=5 // pred_check_branch
        %139 = sbr.rel (%p136) target = $region12
      $region11: #{tpu_custom_call.1} parent=5 // pred_region
        %s140 = ssub.s32 %s16, 1
        // Predicated region
        $region13: #{tpu_custom_call.1} parent=11 // pred_check
          %p141 = pneg %p77
        $region14: #{tpu_custom_call.1} parent=11 // pred_check_branch
          %143 = sbr.rel (%p141) target = $region16
        $region15: #{tpu_custom_call.1} parent=11 // pred_region
          %145 = vsyncadd [#allocation6], 0
          %s147 = sshll.u32 %s1, 4
          %s148 = int_to_ptr.hbm [resolvable:$true] %s147
          %s149 = sshll.u32 [#allocation5], 4
          %s150 = int_to_ptr.vmem [resolvable:$true] %s149
          %152 = dma.hbm_to_vmem [thread:$0]  %s148, 128, %s150, [#allocation6]
        $region16: #{tpu_custom_call.1} parent=11 // pred_fallthru
          _
        // Predicated region
        $region17: #{tpu_custom_call.1} parent=11 // pred_check
          %p153 = pneg %p98
        $region18: #{tpu_custom_call.1} parent=11 // pred_check_branch
          %155 = sbr.rel (%p153) target = $region20
        $region19: #{tpu_custom_call.1} parent=11 // pred_region
          _
        $region20: #{tpu_custom_call.1} parent=11 // pred_fallthru
          _
      $region12: #{tpu_custom_call.1} parent=5 // pred_fallthru
        _
      %p156 = scmp.lt.s32.totalorder %s16, 2
      // Predicated region
      $region21: #{tpu_custom_call.1} parent=5 // pred_check
        %p157 = pneg %p156
      $region22: #{tpu_custom_call.1} parent=5 // pred_check_branch
        %159 = sbr.rel (%p157) target = $region24
      $region23: #{tpu_custom_call.1} parent=5 // pred_region
        // Predicated region
        $region25: #{tpu_custom_call.1} parent=23 // pred_check
          %p160 = pneg %p50
        $region26: #{tpu_custom_call.1} parent=23 // pred_check_branch
          %162 = sbr.rel (%p160) target = $region28
        $region27: #{tpu_custom_call.1} parent=23 // pred_region
          %s163 = sand.u32 %s40, 1
          %s164 = scalar_lea.sflag [#allocation3], %s163
          %s165 = sand.u32 %s40, 1
          %s166 = smul.addr %s165, 8
          %s167 = scalar_lea.vmem [#allocation2], %s166
          %169 = vsyncadd %s164, 0
          %s170 = sadd.s32 %s24, %s23
          %s171 = smul.addr %s170, 8
          %s172 = scalar_lea.hbm %s0, %s171
          %s174 = sshll.u32 %s172, 4
          %s175 = int_to_ptr.hbm [resolvable:$true] %s174
          %s176 = sshll.u32 %s167, 4
          %s177 = int_to_ptr.vmem [resolvable:$true] %s176
          %179 = dma.hbm_to_vmem [thread:$0]  %s175, 128, %s177, %s164
        $region28: #{tpu_custom_call.1} parent=23 // pred_fallthru
          _
      $region24: #{tpu_custom_call.1} parent=5 // pred_fallthru
        _
      %p180 = scmp.le.s32.totalorder 1, %s16
      %p181 = scmp.lt.s32.totalorder %s16, 3
      %p182 = pnand %p180, %p181
      %p183 = pneg %p182
      // Predicated region
      $region29: #{tpu_custom_call.1} parent=5 // pred_check
        _
      $region30: #{tpu_custom_call.1} parent=5 // pred_check_branch
        %185 = sbr.rel (%p182) target = $region32
      $region31: #{tpu_custom_call.1} parent=5 // pred_region
        %s186 = ssub.s32 %s16, 1
        %s187 = sand.u32 %s43, 1
        %s188 = scalar_lea.sflag [#allocation3], %s187
        %s189 = sand.u32 %s43, 1
        %s190 = smul.addr %s189, 8
        %s191 = scalar_lea.vmem [#allocation2], %s190
        // Predicated region
        $region33: #{tpu_custom_call.1} parent=31 // pred_check
          %p192 = pneg %p56
        $region34: #{tpu_custom_call.1} parent=31 // pred_check_branch
          %194 = sbr.rel (%p192) target = $region36
        $region35: #{tpu_custom_call.1} parent=31 // pred_region
          %196 = dma.done %s188, 128
        $region36: #{tpu_custom_call.1} parent=31 // pred_fallthru
          _
        // Predicated region
        $region37: #{tpu_custom_call.1} parent=31 // pred_check
          %p197 = pneg %p77
        $region38: #{tpu_custom_call.1} parent=31 // pred_check_branch
          %199 = sbr.rel (%p197) target = $region40
        $region39: #{tpu_custom_call.1} parent=31 // pred_region
          %201 = dma.done [#allocation6], 128
        $region40: #{tpu_custom_call.1} parent=31 // pred_fallthru
          _
        %s202 = sand.u32 %s43, 1
        %s203 = scalar_lea.sflag [#allocation3], %s202
        %s204 = sand.u32 %s43, 1
        %s205 = smul.addr %s204, 8
        %s206 = scalar_lea.vmem [#allocation2], %s205
        %p207 = pneg %p56
        %p208 = pneg %p53
        %p209 = pneg %p77
        %p210 = pneg %p74
        %p211 = pneg %p98
        %p212 = pneg %p95
        %p213 = pneg %p126
        %p214 = pneg %p123
        %s215 = sand.u32 %s113, 1
        %s216 = scalar_lea.sflag [#allocation4], %s215
        %s217 = sand.u32 %s113, 1
        %s218 = smul.addr %s217, 16
        %s219 = scalar_lea.vmem [#allocation7], %s218
        %s220 = smul.u32 2, %s26
        %v221 = vld [vmem:[%s191] sm:$0xff]
        %v222 = vld [vmem:[#allocation5] sm:$0xff]
        %v223 = vld [vmem:[%s2] sm:$0x1]
        %v225 = vperm.slane %v223, 0
        %227 = vxpose.xlu0.b32.start [1/16] %v221, 128
        %228 = vxpose.xlu0.b32.cont [2/16] 0.0, 128
        %229 = vxpose.xlu0.b32.cont [3/16] 0.0, 128
        %230 = vxpose.xlu0.b32.cont [4/16] 0.0, 128
        %231 = vxpose.xlu0.b32.cont [5/16] 0.0, 128
        %232 = vxpose.xlu0.b32.cont [6/16] 0.0, 128
        %233 = vxpose.xlu0.b32.cont [7/16] 0.0, 128
        %234 = vxpose.xlu0.b32.cont [8/16] 0.0, 128
        %235 = vxpose.xlu0.b32.cont [9/16] 0.0, 128
        %236 = vxpose.xlu0.b32.cont [10/16] 0.0, 128
        %237 = vxpose.xlu0.b32.cont [11/16] 0.0, 128
        %238 = vxpose.xlu0.b32.cont [12/16] 0.0, 128
        %239 = vxpose.xlu0.b32.cont [13/16] 0.0, 128
        %240 = vxpose.xlu0.b32.cont [14/16] 0.0, 128
        %241 = vxpose.xlu0.b32.cont [15/16] 0.0, 128
        %242 = vxpose.xlu0.b32.end [16/16] 0.0, 128
        %v243 = vpop.trf.xlu0
        %v244 = vpop.trf.xlu0
        %v245 = vpop.trf.xlu0
        %v246 = vpop.trf.xlu0
        %v247 = vpop.trf.xlu0
        %v248 = vpop.trf.xlu0
        %v249 = vpop.trf.xlu0
        %v250 = vpop.trf.xlu0
        %v251 = vpop.trf.xlu0
        %v252 = vpop.trf.xlu0
        %v253 = vpop.trf.xlu0
        %v254 = vpop.trf.xlu0
        %v255 = vpop.trf.xlu0
        %v256 = vpop.trf.xlu0
        %v257 = vpop.trf.xlu0
        %v258 = vpop.trf.xlu0
        %vm259 = vcmask 64512
        %v261 = vsel %vm259, %v243, 0
        %v264 = vsel %vm259, %v244, 0
        %266 = vmatpush.msra.mxu0 0.0
        %267 = vmatpush.msra.mxu0 0.0
        %268 = vmatpush.msra.mxu0 0.0
        %269 = vmatpush.msra.mxu0 0.0
        %270 = vmatpush.msra.mxu0 0.0
        %271 = vmatpush.msra.mxu0 0.0
        %272 = vmatpush.msra.mxu0 0.0
        %273 = vmatpush.msra.mxu0 0.0
        %274 = vmatpush.msra.mxu0 0.0
        %275 = vmatpush.msra.mxu0 0.0
        %276 = vmatpush.msra.mxu0 0.0
        %277 = vmatpush.msra.mxu0 0.0
        %278 = vmatpush.msra.mxu0 0.0
        %279 = vmatpush.msra.mxu0 0.0
        %280 = vmatpush.msra.mxu0 0.0
        %281 = vmatpush.msra.mxu0 %v222
        %282 = vmatmul.f32.gmra.mxu0 %v261
        %v283 = vpop.f32.mrf.mxu0
        %v284 = vadd.f32 %v225, %v283
        %285 = vmatmul.f32.gmra.mxu0 %v264
        %v286 = vpop.f32.mrf.mxu0
        %v287 = vadd.f32 %v225, %v286
        %288 = vdwg.mxu0
        %289 = vst [vmem:[%s219] sm:$0xff] %v284
        %290 = vst [vmem:[%s219 + $0x8] sm:$0xff] %v287
        %s291 = sand.u32 %s113, 1
        %s292 = scalar_lea.sflag [#allocation4], %s291
        %s293 = sand.u32 %s113, 1
        %s294 = smul.addr %s293, 16
        %s295 = scalar_lea.vmem [#allocation7], %s294
        // Predicated region
        $region41: #{tpu_custom_call.1} parent=31 // pred_check
          %p296 = pneg %p123
        $region42: #{tpu_custom_call.1} parent=31 // pred_check_branch
          %298 = sbr.rel (%p296) target = $region44
        $region43: #{tpu_custom_call.1} parent=31 // pred_region
          %s299 = smul.u32 2, %s26
          %301 = vsyncadd %s292, 0
          %s302 = smul.addr %s25, 2
          %s303 = sadd.s32 %s299, %s302
          %s304 = smul.addr %s303, 8
          %s305 = scalar_lea.hbm %s3, %s304
          %s306 = sshll.u32 %s295, 4
          %s307 = int_to_ptr.vmem [resolvable:$true] %s306
          %s308 = sshll.u32 %s305, 4
          %s309 = int_to_ptr.hbm [resolvable:$true] %s308
          %314 = dma.vmem_to_hbm [thread:$0]  %s307, 256, %s309, %s292, 128, 128, 8
        $region44: #{tpu_custom_call.1} parent=31 // pred_fallthru
          _
      $region32: #{tpu_custom_call.1} parent=5 // pred_fallthru
        _
      %p315 = scmp.le.s32.totalorder 2, %s16
      // Predicated region
      $region45: #{tpu_custom_call.1} parent=5 // pred_check
        %p316 = pneg %p315
      $region46: #{tpu_custom_call.1} parent=5 // pred_check_branch
        %318 = sbr.rel (%p316) target = $region48
      $region47: #{tpu_custom_call.1} parent=5 // pred_region
        %s319 = ssub.s32 %s16, 2
        // Predicated region
        $region49: #{tpu_custom_call.1} parent=47 // pred_check
          %p320 = pneg %p129
        $region50: #{tpu_custom_call.1} parent=47 // pred_check_branch
          %322 = sbr.rel (%p320) target = $region52
        $region51: #{tpu_custom_call.1} parent=47 // pred_region
          %s323 = sand.u32 %s114, 1
          %s324 = scalar_lea.sflag [#allocation4], %s323
          %s325 = sand.u32 %s114, 1
          %s326 = smul.addr %s325, 16
          %s327 = scalar_lea.vmem [#allocation7], %s326
          %329 = dma.done %s324, 256
        $region52: #{tpu_custom_call.1} parent=47 // pred_fallthru
          _
      $region48: #{tpu_custom_call.1} parent=5 // pred_fallthru
        _
    $region6: #{tpu_custom_call.1} parent=1 // loop_footer
      %s20 = sadd.s32 1, %s16
    $region7: #{tpu_custom_call.1} parent=1 // loop_footer_branch
      %15 = sbr.rel target = $region3
    $region8: #{tpu_custom_call.1} parent=1 // loop_exit
      _
    %330 = vsyncpa [#allocation3], 1
    %s331 = scalar_lea.sflag [#allocation3], 1
    %332 = vsyncpa %s331, 1
    %333 = vsyncpa [#allocation6], 1
    %334 = vsyncpa [#allocation4], 1
    %s335 = scalar_lea.sflag [#allocation4], 1
    %336 = vsyncpa %s335, 1

</llo_original>
